<compile_context>
chip_gen: v7x
topology: tpu7x:2x2x1
jax: 0.10.0
libtpu: 0.0.40
codegen_flags: <defaults>
</compile_context>

<pallas_src>
import jax
import jax.numpy as jnp
from jax.experimental import pallas as pl
from jax.experimental.pallas import tpu as pltpu

LANE = 128      # TPU lane width
SUBLANE = 8     # f32 sublane width
H1 = 64         # fc1 output features (PyTorch spec)
H2 = 128        # fc2 output features (PyTorch spec)
H1_PAD = 128    # fc1 outputs lane-padded to a full vreg (VMEM-only, never HBM)

MAX_TILE_B = 2048   # rows per grid step (amortizes ~0.35 us per-step overhead)
SPLIT_B = 256       # above this batch, force >= 2 grid steps (v7x megacore)


def _round_up(x, m):
    return (x + m - 1) // m * m


def _cdiv(a, b):
    return (a + b - 1) // b


def dqn_mlp_kernel(x_ref, w1_ref, b1_ref, w2_ref, b2_ref, w3_ref, b3_ref, out_ref):
    # Activation cast to bf16 happens in-kernel (VPU; input HBM stream stays
    # the unpadded f32 rows).  Bias reads hoisted (each read exactly once).
    x = x_ref[...].astype(jnp.bfloat16)
    b1 = b1_ref[...]
    b2 = b2_ref[...]
    b3 = b3_ref[...]

    # fc1 + relu: bf16 operands -> MXU, f32 accumulation, f32 VPU epilogue.
    h1 = jnp.dot(x, w1_ref[...], preferred_element_type=jnp.float32)
    h1 = jnp.maximum(h1 + b1, 0.0)

    # fc2 + relu.  (w2's K dim is zero-padded 64->128 so shapes line up with
    # the lane-dense h1; the padded rows multiply zero columns -> exact.)
    h2 = jnp.dot(h1.astype(jnp.bfloat16), w2_ref[...],
                 preferred_element_type=jnp.float32)
    h2 = jnp.maximum(h2 + b2, 0.0)

    # fc3 (no relu), unpadded output columns.
    out = jnp.dot(h2.astype(jnp.bfloat16), w3_ref[...],
                  preferred_element_type=jnp.float32)
    out_ref[...] = (out + b3).astype(out_ref.dtype)


def prepare_params(params):
    """One-time weight prep: bf16 cast + minimal zero-padding (call once, reuse).

    Only fc1/fc2's output (N) dims are padded to 128 lanes; reduction dims and
    fc3 are left at their true sizes, so no padded bytes ever cross HBM per step.
    """
    w1, b1, w2, b2, w3, b3 = (params["w1"], params["b1"], params["w2"],
                              params["b2"], params["w3"], params["b3"])
    S = w1.shape[0]
    A = w3.shape[1]

    w1_p = jnp.zeros((S, H1_PAD), jnp.bfloat16).at[:, :H1].set(w1.astype(jnp.bfloat16))
    b1_p = jnp.zeros((1, H1_PAD), jnp.float32).at[:, :H1].set(b1.reshape(1, H1))
    w2_p = jnp.zeros((H1_PAD, H2), jnp.bfloat16).at[:H1, :].set(w2.astype(jnp.bfloat16))
    b2_p = b2.reshape(1, H2).astype(jnp.float32)
    w3_p = w3.astype(jnp.bfloat16)                 # (H2, A), unpadded
    b3_p = b3.reshape(1, A).astype(jnp.float32)
    return {"w1": w1_p, "b1": b1_p, "w2": w2_p, "b2": b2_p, "w3": w3_p, "b3": b3_p}


@jax.jit
def dqn_forward(state, prepared):
    """state: (B, state_size) f32.  prepared: output of prepare_params()."""
    w1, b1, w2, b2, w3, b3 = (prepared["w1"], prepared["b1"], prepared["w2"],
                              prepared["b2"], prepared["w3"], prepared["b3"])
    B, S = state.shape
    A = w3.shape[1]

    # Batch tiling: big tiles (overhead amortization), but >= 2 grid steps for
    # large batches so v7x's two TensorCores are both used, and a tile size
    # chosen so the final partial tile isn't mostly padding.
    n_tiles = _cdiv(B, MAX_TILE_B)
    if B >= SPLIT_B:
        n_tiles = max(n_tiles, 2)
    tb = max(SUBLANE, _round_up(_cdiv(B, n_tiles), SUBLANE))
    grid = (_cdiv(B, tb),)

    def pinned(shape):
        # Constant index_map -> fetched once, stays VMEM-resident.
        # NOTE: double-buffered footprint of these constants is ~100 KiB
        # total, so we skip pl.Buffered(1); VMEM is nowhere near a limit.
        return pl.BlockSpec(shape, lambda i: (0, 0))

    out = pl.pallas_call(
        dqn_mlp_kernel,
        out_shape=jax.ShapeDtypeStruct((B, A), jnp.float32),
        grid_spec=pltpu.PrefetchScalarGridSpec(
            num_scalar_prefetch=0,
            grid=grid,
            in_specs=[
                pl.BlockSpec((tb, S), lambda i: (i, 0)),   # state tile (f32, unpadded)
                pinned((S, H1_PAD)),                       # w1 (bf16)
                pinned((1, H1_PAD)),                       # b1 (f32)
                pinned((H1_PAD, H2)),                      # w2 (bf16)
                pinned((1, H2)),                           # b2 (f32)
                pinned((H2, A)),                           # w3 (bf16, unpadded)
                pinned((1, A)),                            # b3 (f32, unpadded)
            ],
            out_specs=pl.BlockSpec((tb, A), lambda i: (i, 0)),
        ),
        compiler_params=pltpu.CompilerParams(
            dimension_semantics=("parallel",)),
    )(state, w1, b1, w2, b2, w3, b3)

    return out   # already exactly (B, action_size); no slice copy needed


def init_params(key, state_size, action_size):
    """PyTorch-Linear-style init (uniform +-1/sqrt(fan_in)), weights stored
    transposed as (in, out)."""
    ks = jax.random.split(key, 6)

    def linear(kw, kb, fan_in, fan_out):
        bound = 1.0 / jnp.sqrt(jnp.float32(fan_in))
        w = jax.random.uniform(kw, (fan_in, fan_out), jnp.float32, -bound, bound)
        b = jax.random.uniform(kb, (1, fan_out), jnp.float32, -bound, bound)
        return w, b

    w1, b1 = linear(ks[0], ks[1], state_size, H1)
    w2, b2 = linear(ks[2], ks[3], H1, H2)
    w3, b3 = linear(ks[4], ks[5], H2, action_size)
    return {"w1": w1, "b1": b1, "w2": w2, "b2": b2, "w3": w3, "b3": b3}


def dqn_reference(state, params):
    # Pure f32 JAX reference (PyTorch semantics).
    h1 = jnp.maximum(state @ params["w1"] + params["b1"], 0.0)
    h2 = jnp.maximum(h1 @ params["w2"] + params["b2"], 0.0)
    return h2 @ params["w3"] + params["b3"]


if __name__ == "__main__":
    # total_gates (= state_size = action_size) is runtime data in the original
    # script; pick a small synthetic value.
    state_size = 32
    action_size = 32
    batch = 8

    key = jax.random.PRNGKey(0)
    k_params, k_state, k_state2 = jax.random.split(key, 3)
    raw_params = init_params(k_params, state_size, action_size)
    prepared = prepare_params(raw_params)   # one-time weight prep

    # Small latency-style batch (single grid step).
    state = jax.random.normal(k_state, (batch, state_size), jnp.float32)
    out = jax.block_until_ready(dqn_forward(state, prepared))
    ref = dqn_reference(state, raw_params)
    assert out.shape == (batch, action_size)
    # bf16 MXU operands with f32 accumulation -> loose tolerance vs f32 reference.
    assert jnp.allclose(out, ref, atol=5e-2, rtol=5e-2), "mismatch vs JAX reference"

    # Larger, unevenly-sized batch exercising the multi-step grid and the
    # masked partial last tile (300 rows -> two tiles of 152).
    big_batch = 300
    state2 = jax.random.normal(k_state2, (big_batch, state_size), jnp.float32)
    out2 = jax.block_until_ready(dqn_forward(state2, prepared))
    ref2 = dqn_reference(state2, raw_params)
    assert out2.shape == (big_batch, action_size)
    assert jnp.allclose(out2, ref2, atol=5e-2, rtol=5e-2), "mismatch (batched path)"

    print("KERNEL_OK")
</pallas_src>

<mosaic_0001>
module attributes {stable_mosaic.version = 11 : i64} {
  func.func @dqn_mlp_kernel(%arg0: i32, %arg1: memref<8x32xf32, #tpu.memory_space<vmem>>, %arg2: memref<32x128xbf16, #tpu.memory_space<vmem>>, %arg3: memref<1x128xf32, #tpu.memory_space<vmem>>, %arg4: memref<128x128xbf16, #tpu.memory_space<vmem>>, %arg5: memref<1x128xf32, #tpu.memory_space<vmem>>, %arg6: memref<128x32xbf16, #tpu.memory_space<vmem>>, %arg7: memref<1x32xf32, #tpu.memory_space<vmem>>, %arg8: memref<8x32xf32, #tpu.memory_space<vmem>>) attributes {dimension_semantics = [#tpu.dimension_semantics<parallel>], iteration_bounds = array<i64: 1>, scalar_prefetch = 0 : i64, scratch_operands = 0 : i64, tpu.core_type = #tpu.core_type<tc>, window_params = [{transform_indices = @transform_0, window_bounds = array<i64: 8, 32>}, {pipeline_mode = #tpu.pipeline_mode<synchronous>, transform_indices = @transform_1, window_bounds = array<i64: 32, 128>}, {pipeline_mode = #tpu.pipeline_mode<synchronous>, transform_indices = @transform_2, window_bounds = array<i64: 1, 128>}, {pipeline_mode = #tpu.pipeline_mode<synchronous>, transform_indices = @transform_3, window_bounds = array<i64: 128, 128>}, {pipeline_mode = #tpu.pipeline_mode<synchronous>, transform_indices = @transform_4, window_bounds = array<i64: 1, 128>}, {pipeline_mode = #tpu.pipeline_mode<synchronous>, transform_indices = @transform_5, window_bounds = array<i64: 128, 32>}, {pipeline_mode = #tpu.pipeline_mode<synchronous>, transform_indices = @transform_6, window_bounds = array<i64: 1, 32>}, {transform_indices = @transform_7, window_bounds = array<i64: 8, 32>}]} {
    %c0 = arith.constant 0 : index
    %c0_0 = arith.constant 0 : index
    %0 = vector.load %arg1[%c0, %c0_0] : memref<8x32xf32, #tpu.memory_space<vmem>>, vector<8x32xf32>
    %1 = arith.truncf %0 : vector<8x32xf32> to vector<8x32xbf16>
    %c0_1 = arith.constant 0 : index
    %c0_2 = arith.constant 0 : index
    %2 = vector.load %arg3[%c0_1, %c0_2] : memref<1x128xf32, #tpu.memory_space<vmem>>, vector<1x128xf32>
    %c0_3 = arith.constant 0 : index
    %c0_4 = arith.constant 0 : index
    %3 = vector.load %arg5[%c0_3, %c0_4] : memref<1x128xf32, #tpu.memory_space<vmem>>, vector<1x128xf32>
    %c0_5 = arith.constant 0 : index
    %c0_6 = arith.constant 0 : index
    %4 = vector.load %arg7[%c0_5, %c0_6] : memref<1x32xf32, #tpu.memory_space<vmem>>, vector<1x32xf32>
    %c0_7 = arith.constant 0 : index
    %c0_8 = arith.constant 0 : index
    %5 = vector.load %arg2[%c0_7, %c0_8] : memref<32x128xbf16, #tpu.memory_space<vmem>>, vector<32x128xbf16>
    %cst = arith.constant dense<0.000000e+00> : vector<8x128xf32>
    %6 = tpu.matmul %1, %5, %cst {dimension_numbers = #tpu.dot_dimension_numbers<[1], [0], [0], [1], [0, 0, 1, 1], [], []>} : vector<8x32xbf16>, vector<32x128xbf16>, vector<8x128xf32> -> vector<8x128xf32>
    %7 = vector.broadcast %2 : vector<1x128xf32> to vector<8x128xf32>
    %8 = arith.addf %6, %7 : vector<8x128xf32>
    %cst_9 = arith.constant 0.000000e+00 : f32
    %9 = vector.broadcast %cst_9 : f32 to vector<8x128xf32>
    %10 = arith.maximumf %8, %9 : vector<8x128xf32>
    %11 = arith.truncf %10 : vector<8x128xf32> to vector<8x128xbf16>
    %c0_10 = arith.constant 0 : index
    %c0_11 = arith.constant 0 : index
    %12 = vector.load %arg4[%c0_10, %c0_11] : memref<128x128xbf16, #tpu.memory_space<vmem>>, vector<128x128xbf16>
    %cst_12 = arith.constant dense<0.000000e+00> : vector<8x128xf32>
    %13 = tpu.matmul %11, %12, %cst_12 {dimension_numbers = #tpu.dot_dimension_numbers<[1], [0], [0], [1], [0, 0, 1, 1], [], []>} : vector<8x128xbf16>, vector<128x128xbf16>, vector<8x128xf32> -> vector<8x128xf32>
    %14 = vector.broadcast %3 : vector<1x128xf32> to vector<8x128xf32>
    %15 = arith.addf %13, %14 : vector<8x128xf32>
    %cst_13 = arith.constant 0.000000e+00 : f32
    %16 = vector.broadcast %cst_13 : f32 to vector<8x128xf32>
    %17 = arith.maximumf %15, %16 : vector<8x128xf32>
    %18 = arith.truncf %17 : vector<8x128xf32> to vector<8x128xbf16>
    %c0_14 = arith.constant 0 : index
    %c0_15 = arith.constant 0 : index
    %19 = vector.load %arg6[%c0_14, %c0_15] : memref<128x32xbf16, #tpu.memory_space<vmem>>, vector<128x32xbf16>
    %cst_16 = arith.constant dense<0.000000e+00> : vector<8x32xf32>
    %20 = tpu.matmul %18, %19, %cst_16 {dimension_numbers = #tpu.dot_dimension_numbers<[1], [0], [0], [1], [0, 0, 1, 1], [], []>} : vector<8x128xbf16>, vector<128x32xbf16>, vector<8x32xf32> -> vector<8x32xf32>
    %21 = vector.broadcast %4 : vector<1x32xf32> to vector<8x32xf32>
    %22 = arith.addf %20, %21 : vector<8x32xf32>
    %c0_17 = arith.constant 0 : index
    %c0_18 = arith.constant 0 : index
    %23 = vector.load %arg8[%c0_17, %c0_18] : memref<8x32xf32, #tpu.memory_space<vmem>>, vector<8x32xf32>
    tpu.vector_store %arg8[%c0_17, %c0_18], %22 {strides = array<i32>} : memref<8x32xf32, #tpu.memory_space<vmem>>, vector<8x32xf32>,
    return
  }
  func.func @transform_0(%arg0: i32) -> (i32, i32) {
    %c0_i32 = arith.constant 0 : i32
    %c0_i32_0 = arith.constant 0 : i32
    return %arg0, %c0_i32 : i32, i32
  }
  func.func @transform_1(%arg0: i32) -> (i32, i32) {
    %c0_i32 = arith.constant 0 : i32
    %c0_i32_0 = arith.constant 0 : i32
    %c0_i32_1 = arith.constant 0 : i32
    return %c0_i32, %c0_i32_0 : i32, i32
  }
  func.func @transform_2(%arg0: i32) -> (i32, i32) {
    %c0_i32 = arith.constant 0 : i32
    %c0_i32_0 = arith.constant 0 : i32
    %c0_i32_1 = arith.constant 0 : i32
    return %c0_i32, %c0_i32_0 : i32, i32
  }
  func.func @transform_3(%arg0: i32) -> (i32, i32) {
    %c0_i32 = arith.constant 0 : i32
    %c0_i32_0 = arith.constant 0 : i32
    %c0_i32_1 = arith.constant 0 : i32
    return %c0_i32, %c0_i32_0 : i32, i32
  }
  func.func @transform_4(%arg0: i32) -> (i32, i32) {
    %c0_i32 = arith.constant 0 : i32
    %c0_i32_0 = arith.constant 0 : i32
    %c0_i32_1 = arith.constant 0 : i32
    return %c0_i32, %c0_i32_0 : i32, i32
  }
  func.func @transform_5(%arg0: i32) -> (i32, i32) {
    %c0_i32 = arith.constant 0 : i32
    %c0_i32_0 = arith.constant 0 : i32
    %c0_i32_1 = arith.constant 0 : i32
    return %c0_i32, %c0_i32_0 : i32, i32
  }
  func.func @transform_6(%arg0: i32) -> (i32, i32) {
    %c0_i32 = arith.constant 0 : i32
    %c0_i32_0 = arith.constant 0 : i32
    %c0_i32_1 = arith.constant 0 : i32
    return %c0_i32, %c0_i32_0 : i32, i32
  }
  func.func @transform_7(%arg0: i32) -> (i32, i32) {
    %c0_i32 = arith.constant 0 : i32
    %c0_i32_0 = arith.constant 0 : i32
    return %arg0, %c0_i32 : i32, i32
  }
}

</mosaic_0001>

<llo_original>
// kernel: dqn_forward.1
$region0: #{dqn_forward.1}
  #allocation0 [shape = 'u32[]', space=smem, size = 0x4, offset = 0x4, fixed_abs, tag = 'smem constant byte address 0x4 - core index']
  #allocation1 [shape = 'u32[144,128]{1,0:T(1,128)}', space=vmem, size = 0x12000, scoped, tag = 'internal scratch']
  %s0 = inlined_call_operand.hbm [shape: f32[8,32], index: 0, kind: input, shape index: {}]
  %s1 = inlined_call_operand.vmem [shape: bf16[32,128], index: 1, kind: input, shape index: {}]
  %s2 = inlined_call_operand.vmem [shape: f32[1,128], index: 2, kind: input, shape index: {}]
  %s3 = inlined_call_operand.vmem [shape: bf16[128,128], index: 3, kind: input, shape index: {}]
  %s4 = inlined_call_operand.vmem [shape: f32[1,128], index: 4, kind: input, shape index: {}]
  %s5 = inlined_call_operand.vmem [shape: bf16[128,32], index: 5, kind: input, shape index: {}]
  %s6 = inlined_call_operand.vmem [shape: f32[1,32], index: 6, kind: input, shape index: {}]
  %s7 = inlined_call_operand.hbm [shape: f32[8,32], index: 7, kind: output, shape index: {}]
  %s8 = sld [smem:[#allocation0]]
  $region42: #{dqn_forward.1} parent=0
    _
  %s10 = ssub.s32 1, %s8
  %s11 = scalar_select 0, %s10, %s8
  $region1: #{dqn_forward.1} parent=0
    #allocation2 [shape = 'u8[4096]{0}', space=vmem, size = 0x1000, scoped, tag = 'input window, operand 0, single buffered']
    #allocation3 [shape = 's32[1]{0}', space=sflag, size = 0x4, scoped, tag = 'scoped memory for dqn_forward.1']
    #allocation4 [shape = 's32[1]{0}', space=sflag, size = 0x4, scoped, tag = 'scoped memory for dqn_forward.1']
    #allocation5 [shape = 'u8[4096]{0}', space=vmem, size = 0x1000, scoped, tag = 'output window, operand 0, single buffered']
    %12 = vsyncpa [#allocation3], 0
    %13 = vsyncpa [#allocation4], 0
    // Predicated region
    $region2: #{dqn_forward.1} parent=1 // pred_check
      _
    $region3: #{dqn_forward.1} parent=1 // pred_check_branch
      %15 = sbr.rel (0) target = $region5
    $region4: #{dqn_forward.1} parent=1 // pred_region
      %s17 = ssub.s32 128, 128
      %18 = vsyncadd [#allocation3], %s17
      %s20 = sshll.u32 [#allocation2], 4
      %s21 = int_to_ptr.vmem [resolvable:$true] %s20
      %23 = dma.hbm_to_vmem [thread:$0]  %s0, 128, %s21, [#allocation3]
    $region5: #{dqn_forward.1} parent=1 // pred_fallthru
      _
    // Predicated region
    $region6: #{dqn_forward.1} parent=1 // pred_check
      _
    $region7: #{dqn_forward.1} parent=1 // pred_check_branch
      %25 = sbr.rel (0) target = $region9
    $region8: #{dqn_forward.1} parent=1 // pred_region
      _
    $region9: #{dqn_forward.1} parent=1 // pred_fallthru
      _
    // Predicated region
    $region10: #{dqn_forward.1} parent=1 // pred_check
      _
    $region11: #{dqn_forward.1} parent=1 // pred_check_branch
      %27 = sbr.rel (0) target = $region13
    $region12: #{dqn_forward.1} parent=1 // pred_region
      _
    $region13: #{dqn_forward.1} parent=1 // pred_fallthru
      _
    // Predicated region
    $region14: #{dqn_forward.1} parent=1 // pred_check
      _
    $region15: #{dqn_forward.1} parent=1 // pred_check_branch
      %29 = sbr.rel (0) target = $region17
    $region16: #{dqn_forward.1} parent=1 // pred_region
      _
    $region17: #{dqn_forward.1} parent=1 // pred_fallthru
      _
    // Predicated region
    $region18: #{dqn_forward.1} parent=1 // pred_check
      _
    $region19: #{dqn_forward.1} parent=1 // pred_check_branch
      %31 = sbr.rel (0) target = $region21
    $region20: #{dqn_forward.1} parent=1 // pred_region
      _
    $region21: #{dqn_forward.1} parent=1 // pred_fallthru
      _
    // Predicated region
    $region22: #{dqn_forward.1} parent=1 // pred_check
      _
    $region23: #{dqn_forward.1} parent=1 // pred_check_branch
      %33 = sbr.rel (0) target = $region25
    $region24: #{dqn_forward.1} parent=1 // pred_region
      _
    $region25: #{dqn_forward.1} parent=1 // pred_fallthru
      _
    // Predicated region
    $region26: #{dqn_forward.1} parent=1 // pred_check
      _
    $region27: #{dqn_forward.1} parent=1 // pred_check_branch
      %35 = sbr.rel (0) target = $region29
    $region28: #{dqn_forward.1} parent=1 // pred_region
      _
    $region29: #{dqn_forward.1} parent=1 // pred_fallthru
      _
    // Predicated region
    $region30: #{dqn_forward.1} parent=1 // pred_check
      _
    $region31: #{dqn_forward.1} parent=1 // pred_check_branch
      %37 = sbr.rel (0) target = $region33
    $region32: #{dqn_forward.1} parent=1 // pred_region
      %38 = dma.done [#allocation3], 128
    $region33: #{dqn_forward.1} parent=1 // pred_fallthru
      _
    %v40 = vld [vmem:[#allocation2] sm:$0xff]
    %v41 = vpack.c.bf16 %v40, %v40
    %v42 = vld [vmem:[%s2] sm:$0x1]
    %v43 = vld [vmem:[%s4] sm:$0x1]
    %v44 = vld [vmem:[%s6] sm:$0x1]
    %v45 = vld [vmem:[%s1] sm:$0xf]
    %v46 = vld [vmem:[%s1 + $0x4] sm:$0xf]
    %v47 = vld [vmem:[%s1 + $0x8] sm:$0xf]
    %v48 = vld [vmem:[%s1 + $0xc] sm:$0xf]
    %v50 = vlaneseq
    %v51 = vshrl.u32 %v50, 7
    %v52 = vsub.s32 0, %v51
    %v53 = vrot.slane %v42, %v52
    %v59 = vunpack.c.l.b16 %v45
    %v60 = vunpack.c.l.b16 %v46
    %v61 = vunpack.c.l.b16 %v47
    %v62 = vunpack.c.l.b16 %v48
    %v63 = vpack.c.b16 %v60, %v59
    %v64 = vpack.c.b16 %v62, %v61
    %vm67 = vcmask 261120
    %v69 = vsel %vm67, %v41, 0
    %71 = vmatprep.subr.bf16.mxu0 0
    %72 = vmatpush1.bf16.msra.mxu0 %v63
    %73 = vmatprep.subr.bf16.mxu0 0
    %74 = vmatpush1.bf16.msra.mxu0 %v64
    %75 = vmatprep.subr.bf16.mxu0 0
    %76 = vmatpush1.bf16.msra.mxu0 0
    %77 = vmatprep.subr.bf16.mxu0 0
    %78 = vmatpush1.bf16.msra.mxu0 0
    %79 = vmatprep.subr.bf16.mxu0 0
    %80 = vmatpush1.bf16.msra.mxu0 0
    %81 = vmatprep.subr.bf16.mxu0 0
    %82 = vmatpush1.bf16.msra.mxu0 0
    %83 = vmatprep.subr.bf16.mxu0 0
    %84 = vmatpush1.bf16.msra.mxu0 0
    %85 = vmatprep.subr.bf16.mxu0 0
    %86 = vmatpush1.bf16.msra.mxu0 0
    %87 = vmatprep.subr.bf16.mxu0 0
    %88 = vmatpush1.bf16.msra.mxu0 0
    %89 = vmatprep.subr.bf16.mxu0 0
    %90 = vmatpush1.bf16.msra.mxu0 0
    %91 = vmatprep.subr.bf16.mxu0 0
    %92 = vmatpush1.bf16.msra.mxu0 0
    %93 = vmatprep.subr.bf16.mxu0 0
    %94 = vmatpush1.bf16.msra.mxu0 0
    %95 = vmatprep.subr.bf16.mxu0 0
    %96 = vmatpush1.bf16.msra.mxu0 0
    %97 = vmatprep.subr.bf16.mxu0 0
    %98 = vmatpush1.bf16.msra.mxu0 0
    %99 = vmatprep.subr.bf16.mxu0 0
    %100 = vmatpush1.bf16.msra.mxu0 0
    %101 = vmatprep.subr.bf16.mxu0 0
    %102 = vmatpush1.bf16.msra.mxu0 0
    %103 = vmatprep.mubr.bf16.mxu0 0
    %104 = vmatmul.mubr.bf16.gmra.mrb[0].mxu0 %v69
    %v105 = vpop.f32.mrb[0].mxu0
    %v106 = vadd.f32 %v53, %v105
    %v107 = vpop.f32.mrb[0].mxu0
    %v108 = vpop.f32.mrb[0].mxu0
    %v109 = vpop.f32.mrb[0].mxu0
    %110 = vdwg.mxu0
    %v111 = vmax.f32 %v106, 0.0
    %v112 = vpack.c.bf16 %v111, %v111
    %v113 = vld [vmem:[%s3] sm:$0xf]
    %v114 = vld [vmem:[%s3 + $0x4] sm:$0xf]
    %v115 = vld [vmem:[%s3 + $0x8] sm:$0xf]
    %v116 = vld [vmem:[%s3 + $0xc] sm:$0xf]
    %v117 = vld [vmem:[%s3 + $0x10] sm:$0xf]
    %v118 = vld [vmem:[%s3 + $0x14] sm:$0xf]
    %v119 = vld [vmem:[%s3 + $0x18] sm:$0xf]
    %v120 = vld [vmem:[%s3 + $0x1c] sm:$0xf]
    %v121 = vld [vmem:[%s3 + $0x20] sm:$0xf]
    %v122 = vld [vmem:[%s3 + $0x24] sm:$0xf]
    %v123 = vld [vmem:[%s3 + $0x28] sm:$0xf]
    %v124 = vld [vmem:[%s3 + $0x2c] sm:$0xf]
    %v125 = vld [vmem:[%s3 + $0x30] sm:$0xf]
    %v126 = vld [vmem:[%s3 + $0x34] sm:$0xf]
    %v127 = vld [vmem:[%s3 + $0x38] sm:$0xf]
    %v128 = vld [vmem:[%s3 + $0x3c] sm:$0xf]
    %v130 = vlaneseq
    %v131 = vshrl.u32 %v130, 7
    %v132 = vsub.s32 0, %v131
    %v133 = vrot.slane %v43, %v132
    %v151 = vunpack.c.l.b16 %v113
    %v152 = vunpack.c.l.b16 %v114
    %v153 = vunpack.c.l.b16 %v115
    %v154 = vunpack.c.l.b16 %v116
    %v155 = vunpack.c.l.b16 %v117
    %v156 = vunpack.c.l.b16 %v118
    %v157 = vunpack.c.l.b16 %v119
    %v158 = vunpack.c.l.b16 %v120
    %v159 = vunpack.c.l.b16 %v121
    %v160 = vunpack.c.l.b16 %v122
    %v161 = vunpack.c.l.b16 %v123
    %v162 = vunpack.c.l.b16 %v124
    %v163 = vunpack.c.l.b16 %v125
    %v164 = vunpack.c.l.b16 %v126
    %v165 = vunpack.c.l.b16 %v127
    %v166 = vunpack.c.l.b16 %v128
    %v167 = vpack.c.b16 %v152, %v151
    %v168 = vpack.c.b16 %v154, %v153
    %v169 = vpack.c.b16 %v156, %v155
    %v170 = vpack.c.b16 %v158, %v157
    %v171 = vpack.c.b16 %v160, %v159
    %v172 = vpack.c.b16 %v162, %v161
    %v173 = vpack.c.b16 %v164, %v163
    %v174 = vpack.c.b16 %v166, %v165
    %183 = vmatprep.subr.bf16.mxu0 0
    %184 = vmatpush1.bf16.msra.mxu0 %v167
    %185 = vmatprep.subr.bf16.mxu0 0
    %186 = vmatpush1.bf16.msra.mxu0 %v168
    %187 = vmatprep.subr.bf16.mxu0 0
    %188 = vmatpush1.bf16.msra.mxu0 %v169
    %189 = vmatprep.subr.bf16.mxu0 0
    %190 = vmatpush1.bf16.msra.mxu0 %v170
    %191 = vmatprep.subr.bf16.mxu0 0
    %192 = vmatpush1.bf16.msra.mxu0 %v171
    %193 = vmatprep.subr.bf16.mxu0 0
    %194 = vmatpush1.bf16.msra.mxu0 %v172
    %195 = vmatprep.subr.bf16.mxu0 0
    %196 = vmatpush1.bf16.msra.mxu0 %v173
    %197 = vmatprep.subr.bf16.mxu0 0
    %198 = vmatpush1.bf16.msra.mxu0 %v174
    %199 = vmatprep.subr.bf16.mxu0 0
    %200 = vmatpush1.bf16.msra.mxu0 0
    %201 = vmatprep.subr.bf16.mxu0 0
    %202 = vmatpush1.bf16.msra.mxu0 0
    %203 = vmatprep.subr.bf16.mxu0 0
    %204 = vmatpush1.bf16.msra.mxu0 0
    %205 = vmatprep.subr.bf16.mxu0 0
    %206 = vmatpush1.bf16.msra.mxu0 0
    %207 = vmatprep.subr.bf16.mxu0 0
    %208 = vmatpush1.bf16.msra.mxu0 0
    %209 = vmatprep.subr.bf16.mxu0 0
    %210 = vmatpush1.bf16.msra.mxu0 0
    %211 = vmatprep.subr.bf16.mxu0 0
    %212 = vmatpush1.bf16.msra.mxu0 0
    %213 = vmatprep.subr.bf16.mxu0 0
    %214 = vmatpush1.bf16.msra.mxu0 0
    %215 = vmatprep.mubr.bf16.mxu0 0
    %216 = vmatmul.mubr.bf16.gmra.mrb[0].mxu0 %v112
    %v217 = vpop.f32.mrb[0].mxu0
    %v218 = vadd.f32 %v133, %v217
    %v219 = vpop.f32.mrb[0].mxu0
    %v220 = vpop.f32.mrb[0].mxu0
    %v221 = vpop.f32.mrb[0].mxu0
    %222 = vdwg.mxu0
    %v223 = vmax.f32 %v218, 0.0
    %v224 = vpack.c.bf16 %v223, %v223
    %v225 = vld [vmem:[%s5] sm:$0xf]
    %v226 = vld [vmem:[%s5 + $0x4] sm:$0xf]
    %v227 = vld [vmem:[%s5 + $0x8] sm:$0xf]
    %v228 = vld [vmem:[%s5 + $0xc] sm:$0xf]
    %v229 = vld [vmem:[%s5 + $0x10] sm:$0xf]
    %v230 = vld [vmem:[%s5 + $0x14] sm:$0xf]
    %v231 = vld [vmem:[%s5 + $0x18] sm:$0xf]
    %v232 = vld [vmem:[%s5 + $0x1c] sm:$0xf]
    %v233 = vld [vmem:[%s5 + $0x20] sm:$0xf]
    %v234 = vld [vmem:[%s5 + $0x24] sm:$0xf]
    %v235 = vld [vmem:[%s5 + $0x28] sm:$0xf]
    %v236 = vld [vmem:[%s5 + $0x2c] sm:$0xf]
    %v237 = vld [vmem:[%s5 + $0x30] sm:$0xf]
    %v238 = vld [vmem:[%s5 + $0x34] sm:$0xf]
    %v239 = vld [vmem:[%s5 + $0x38] sm:$0xf]
    %v240 = vld [vmem:[%s5 + $0x3c] sm:$0xf]
    %v242 = vlaneseq
    %v243 = vshrl.u32 %v242, 7
    %v244 = vsub.s32 0, %v243
    %v245 = vrot.slane %v44, %v244
    %v263 = vunpack.c.l.b16 %v225
    %v264 = vunpack.c.l.b16 %v226
    %v265 = vunpack.c.l.b16 %v227
    %v266 = vunpack.c.l.b16 %v228
    %v267 = vunpack.c.l.b16 %v229
    %v268 = vunpack.c.l.b16 %v230
    %v269 = vunpack.c.l.b16 %v231
    %v270 = vunpack.c.l.b16 %v232
    %v271 = vunpack.c.l.b16 %v233
    %v272 = vunpack.c.l.b16 %v234
    %v273 = vunpack.c.l.b16 %v235
    %v274 = vunpack.c.l.b16 %v236
    %v275 = vunpack.c.l.b16 %v237
    %v276 = vunpack.c.l.b16 %v238
    %v277 = vunpack.c.l.b16 %v239
    %v278 = vunpack.c.l.b16 %v240
    %v279 = vpack.c.b16 %v264, %v263
    %v280 = vpack.c.b16 %v266, %v265
    %v281 = vpack.c.b16 %v268, %v267
    %v282 = vpack.c.b16 %v270, %v269
    %v283 = vpack.c.b16 %v272, %v271
    %v284 = vpack.c.b16 %v274, %v273
    %v285 = vpack.c.b16 %v276, %v275
    %v286 = vpack.c.b16 %v278, %v277
    %295 = vmatprep.subr.bf16.mxu0 0
    %296 = vmatpush1.bf16.msra.mxu0 %v279
    %297 = vmatprep.subr.bf16.mxu0 0
    %298 = vmatpush1.bf16.msra.mxu0 %v280
    %299 = vmatprep.subr.bf16.mxu0 0
    %300 = vmatpush1.bf16.msra.mxu0 %v281
    %301 = vmatprep.subr.bf16.mxu0 0
    %302 = vmatpush1.bf16.msra.mxu0 %v282
    %303 = vmatprep.subr.bf16.mxu0 0
    %304 = vmatpush1.bf16.msra.mxu0 %v283
    %305 = vmatprep.subr.bf16.mxu0 0
    %306 = vmatpush1.bf16.msra.mxu0 %v284
    %307 = vmatprep.subr.bf16.mxu0 0
    %308 = vmatpush1.bf16.msra.mxu0 %v285
    %309 = vmatprep.subr.bf16.mxu0 0
    %310 = vmatpush1.bf16.msra.mxu0 %v286
    %311 = vmatprep.subr.bf16.mxu0 0
    %312 = vmatpush1.bf16.msra.mxu0 0
    %313 = vmatprep.subr.bf16.mxu0 0
    %314 = vmatpush1.bf16.msra.mxu0 0
    %315 = vmatprep.subr.bf16.mxu0 0
    %316 = vmatpush1.bf16.msra.mxu0 0
    %317 = vmatprep.subr.bf16.mxu0 0
    %318 = vmatpush1.bf16.msra.mxu0 0
    %319 = vmatprep.subr.bf16.mxu0 0
    %320 = vmatpush1.bf16.msra.mxu0 0
    %321 = vmatprep.subr.bf16.mxu0 0
    %322 = vmatpush1.bf16.msra.mxu0 0
    %323 = vmatprep.subr.bf16.mxu0 0
    %324 = vmatpush1.bf16.msra.mxu0 0
    %325 = vmatprep.subr.bf16.mxu0 0
    %326 = vmatpush1.bf16.msra.mxu0 0
    %327 = vmatprep.mubr.bf16.mxu0 0
    %328 = vmatmul.mubr.bf16.gmra.mrb[0].mxu0 %v224
    %v329 = vpop.f32.mrb[0].mxu0
    %v330 = vadd.f32 %v245, %v329
    %v331 = vpop.f32.mrb[0].mxu0
    %v332 = vpop.f32.mrb[0].mxu0
    %v333 = vpop.f32.mrb[0].mxu0
    %334 = vdwg.mxu0
    %335 = vst.msk [vmem:[#allocation5] sm:$0xff] %vm67, %v330
    // Predicated region
    $region34: #{dqn_forward.1} parent=1 // pred_check
      _
    $region35: #{dqn_forward.1} parent=1 // pred_check_branch
      %337 = sbr.rel (0) target = $region37
    $region36: #{dqn_forward.1} parent=1 // pred_region
      %s339 = ssub.s32 128, 128
      %340 = vsyncadd [#allocation4], %s339
      %s342 = sshll.u32 [#allocation5], 4
      %s343 = int_to_ptr.vmem [resolvable:$true] %s342
      %345 = dma.vmem_to_hbm [thread:$0]  %s343, 128, %s7, [#allocation4]
    $region37: #{dqn_forward.1} parent=1 // pred_fallthru
      _
    // Predicated region
    $region38: #{dqn_forward.1} parent=1 // pred_check
      _
    $region39: #{dqn_forward.1} parent=1 // pred_check_branch
      %347 = sbr.rel (0) target = $region41
    $region40: #{dqn_forward.1} parent=1 // pred_region
      %348 = dma.done [#allocation4], 128
    $region41: #{dqn_forward.1} parent=1 // pred_fallthru
      _
    %349 = vsyncpa [#allocation3], 1
    %350 = vsyncpa [#allocation4], 1

</llo_original>
